<compile_context>
chip_gen: v5e
topology: v5e:2x2
jax: 0.10.0
libtpu: 0.0.40
codegen_flags: <defaults>
</compile_context>

<pallas_src>
import jax
import jax.numpy as jnp
from jax.experimental import pallas as pl
from jax.experimental.pallas import tpu as pltpu

_MIB = 1 << 20
# Above this Gram footprint (2 * D * D * 4 bytes) the monolithic path no longer
# fits comfortably in scoped VMEM on every generation (v7x: 64 MiB physical).
_MONOLITHIC_GRAM_BYTES_MAX = 16 * _MIB

_BATCH_CONTRACT = (((0,), (0,)), ((), ()))   # contract over batch axis of both
_ROW_BY_MAT = (((1,), (0,)), ((), ()))       # [1, D] @ [D, D]


def _round_up(v: int, m: int) -> int:
    return ((v + m - 1) // m) * m


def _pick_tile_b(B: int, bytes_per_batch_row: int, budget_bytes: int) -> int:
    """Largest batch tile (multiple of 8, dividing B) whose double-buffered input
    pipeline fits `budget_bytes`.  Big tiles matter: tile_b is the MXU contraction
    depth of the Gram matmuls and amortizes per-grid-step overhead."""
    for t in (2048, 1024, 512, 256, 128, 64, 32, 16, 8):
        if t <= B and B % t == 0 and t * bytes_per_batch_row <= budget_bytes:
            return t
    return B   # tiny / awkward batch: single block covering the whole batch


# --------------------------------------------------------------------------
# Path 1: monolithic Gram (moderate D)
# --------------------------------------------------------------------------
def _make_monolithic_kernel(inv_coeff, var_coeff, cov_coeff, gamma, B, D, gram_dtype):
    inv_B = 1.0 / B
    inv_Bm1 = 1.0 / (B - 1)

    def kernel(x_ref, y_ref, o_ref,
               ssd_ref, sx_ref, sy_ref, sxx_ref, syy_ref, gx_ref, gy_ref):
        step = pl.program_id(0)

        @pl.when(step == 0)
        def _init():
            ssd_ref[...] = jnp.zeros_like(ssd_ref)
            sx_ref[...] = jnp.zeros_like(sx_ref)
            sy_ref[...] = jnp.zeros_like(sy_ref)
            sxx_ref[...] = jnp.zeros_like(sxx_ref)
            syy_ref[...] = jnp.zeros_like(syy_ref)
            gx_ref[...] = jnp.zeros_like(gx_ref)
            gy_ref[...] = jnp.zeros_like(gy_ref)

        x = x_ref[...].astype(jnp.float32)   # [tile_b, D]
        y = y_ref[...].astype(jnp.float32)

        diff = x - y
        ssd_ref[...] += jnp.sum(diff * diff, axis=0, keepdims=True)
        sx_ref[...] += jnp.sum(x, axis=0, keepdims=True)
        sy_ref[...] += jnp.sum(y, axis=0, keepdims=True)
        sxx_ref[...] += jnp.sum(x * x, axis=0, keepdims=True)
        syy_ref[...] += jnp.sum(y * y, axis=0, keepdims=True)

        xg = x.astype(gram_dtype)
        yg = y.astype(gram_dtype)
        gx_ref[...] += jax.lax.dot_general(
            xg, xg, dimension_numbers=_BATCH_CONTRACT,
            preferred_element_type=jnp.float32)                 # [D, D]
        gy_ref[...] += jax.lax.dot_general(
            yg, yg, dimension_numbers=_BATCH_CONTRACT,
            preferred_element_type=jnp.float32)

        @pl.when(step == pl.num_programs(0) - 1)
        def _finalize():
            inv_loss = inv_coeff * (jnp.sum(ssd_ref[...]) / (B * D))

            def var_and_cov(s_ref, ss_ref, g_ref):
                s = s_ref[...]                                   # [1, D]
                css = ss_ref[...] - s * s * inv_B                # centered sum sq
                var = css * inv_Bm1                              # diag(cov)
                std = jnp.sqrt(jnp.maximum(var, 0.0))            # no eps (torch.std)
                var_l = jnp.sum(jnp.maximum(gamma - std, 0.0)) / D
                g = g_ref[...]
                sum_g2 = jnp.sum(g * g)
                gs = jax.lax.dot_general(s, g, dimension_numbers=_ROW_BY_MAT,
                                         preferred_element_type=jnp.float32)
                sgs = jnp.sum(gs * s)                            # s G s^T
                sum_s2 = jnp.sum(s * s)
                sum_gc2 = sum_g2 - 2.0 * inv_B * sgs + (sum_s2 * sum_s2) * inv_B * inv_B
                sum_cov2 = sum_gc2 * inv_Bm1 * inv_Bm1
                cov_l = (sum_cov2 - jnp.sum(var * var)) / D      # drop diagonal
                return var_l, cov_l

            vx, cx = var_and_cov(sx_ref, sxx_ref, gx_ref)
            vy, cy = var_and_cov(sy_ref, syy_ref, gy_ref)
            var_loss = var_coeff * (vx + vy) * 0.5
            cov_loss = cov_coeff * (cx + cy) * 0.5
            o_ref[0] = inv_loss + var_loss + cov_loss
            o_ref[1] = inv_loss
            o_ref[2] = var_loss
            o_ref[3] = cov_loss

    return kernel


def _vicreg_monolithic(x, y, inv_coeff, var_coeff, cov_coeff, gamma,
                       tile_b, gram_dtype):
    B, D = x.shape
    itemsize = max(x.dtype.itemsize, y.dtype.itemsize)
    d_pad = _round_up(D, 128)

    # Honest VMEM accounting: Gram scratch + the five [1,D] (sublane-padded)
    # accumulators + the double-buffered input pipeline.
    scratch_bytes = (2 * _round_up(D, 8) * d_pad * 4      # Gx, Gy
                     + 5 * 8 * d_pad * 4)                  # ssd, sx, sy, sxx, syy
    in_bytes_per_row = 2 * 2 * d_pad * itemsize            # 2 inputs x 2 pipeline bufs
    if tile_b is None:
        in_budget = max(40 * _MIB - scratch_bytes - 2 * _MIB, 8 * in_bytes_per_row)
        tile_b = _pick_tile_b(B, in_bytes_per_row, in_budget)
    assert B % tile_b == 0, f"tile_b={tile_b} must divide B={B}"
    need = scratch_bytes + tile_b * in_bytes_per_row
    vmem_limit = int(min(max(need + 16 * _MIB, 32 * _MIB), 112 * _MIB))
    num_tiles = B // tile_b

    kernel = _make_monolithic_kernel(float(inv_coeff), float(var_coeff),
                                     float(cov_coeff), float(gamma), B, D,
                                     gram_dtype)
    return pl.pallas_call(
        kernel,
        out_shape=jax.ShapeDtypeStruct((4,), jnp.float32),
        grid_spec=pltpu.PrefetchScalarGridSpec(
            num_scalar_prefetch=0,
            grid=(num_tiles,),
            in_specs=[
                pl.BlockSpec((tile_b, D), lambda i: (i, 0)),
                pl.BlockSpec((tile_b, D), lambda i: (i, 0)),
            ],
            out_specs=pl.BlockSpec(memory_space=pltpu.SMEM),
            scratch_shapes=[
                pltpu.VMEM((1, D), jnp.float32),   # sum((x-y)^2) per dim
                pltpu.VMEM((1, D), jnp.float32),   # sum(x)
                pltpu.VMEM((1, D), jnp.float32),   # sum(y)
                pltpu.VMEM((1, D), jnp.float32),   # sum(x^2)
                pltpu.VMEM((1, D), jnp.float32),   # sum(y^2)
                pltpu.VMEM((D, D), jnp.float32),   # Gram X^T X
                pltpu.VMEM((D, D), jnp.float32),   # Gram Y^T Y
            ],
        ),
        compiler_params=pltpu.CompilerParams(
            dimension_semantics=("arbitrary",),
            vmem_limit_bytes=vmem_limit),
    )(x, y)


# --------------------------------------------------------------------------
# Path 2: D-tiled symmetric Gram (large D)
# --------------------------------------------------------------------------
def _make_tiled_kernel(inv_coeff, var_coeff, cov_coeff, gamma, B, D, gram_dtype):
    inv_B = 1.0 / B
    inv_Bm1 = 1.0 / (B - 1)
    # SMEM scalar accumulator slots: 0=ssd, 1=sumG2_x, 2=sumG2_y, 3=sGs_x, 4=sGs_y
    N_ACC = 5

    def kernel(bi_ref, bj_ref,                      # scalar-prefetch pair indices
               xi_ref, xj_ref, yi_ref, yj_ref,      # [tile_b, tile_d] lane slices
               o_ref,
               gx_ref, gy_ref,                      # [tile_d, tile_d] Gram blocks
               sx_ref, sy_ref, sxx_ref, syy_ref,    # [n_dblk, tile_d] per-dim sums
               acc_sm):                              # SMEM scalar accumulators
        p = pl.program_id(0)
        k = pl.program_id(1)
        n_p = pl.num_programs(0)
        n_k = pl.num_programs(1)
        bi = bi_ref[p]
        bj = bj_ref[p]

        @pl.when(jnp.logical_and(p == 0, k == 0))
        def _global_init():
            sx_ref[...] = jnp.zeros_like(sx_ref)
            sy_ref[...] = jnp.zeros_like(sy_ref)
            sxx_ref[...] = jnp.zeros_like(sxx_ref)
            syy_ref[...] = jnp.zeros_like(syy_ref)
            for t in range(N_ACC):
                acc_sm[t] = 0.0

        @pl.when(k == 0)
        def _pair_init():
            gx_ref[...] = jnp.zeros_like(gx_ref)
            gy_ref[...] = jnp.zeros_like(gy_ref)

        xi = xi_ref[...].astype(jnp.float32)   # column-slice bi of x
        xj = xj_ref[...].astype(jnp.float32)   # column-slice bj of x
        yi = yi_ref[...].astype(jnp.float32)
        yj = yj_ref[...].astype(jnp.float32)

        # Per-dim sums: accumulate each column slice exactly once -- during the
        # bi == 0 pairs, which cover every bj (upper-triangle, row-major order).
        @pl.when(bi == 0)
        def _stats():
            row = pl.ds(bj, 1)
            sx_ref[row, :] = sx_ref[row, :] + jnp.sum(xj, axis=0, keepdims=True)
            sy_ref[row, :] = sy_ref[row, :] + jnp.sum(yj, axis=0, keepdims=True)
            sxx_ref[row, :] = sxx_ref[row, :] + jnp.sum(xj * xj, axis=0, keepdims=True)
            syy_ref[row, :] = syy_ref[row, :] + jnp.sum(yj * yj, axis=0, keepdims=True)
            d = xj - yj
            acc_sm[0] += jnp.sum(d * d)

        gx_ref[...] += jax.lax.dot_general(
            xi.astype(gram_dtype), xj.astype(gram_dtype),
            dimension_numbers=_BATCH_CONTRACT, preferred_element_type=jnp.float32)
        gy_ref[...] += jax.lax.dot_general(
            yi.astype(gram_dtype), yj.astype(gram_dtype),
            dimension_numbers=_BATCH_CONTRACT, preferred_element_type=jnp.float32)

        # Per-pair finalize: fold this Gram block into the scalar accumulators.
        # Off-diagonal blocks count twice (symmetry of X^T X).
        @pl.when(k == n_k - 1)
        def _pair_final():
            w = jnp.where(bi == bj, jnp.float32(1.0), jnp.float32(2.0))
            gx = gx_ref[...]
            gy = gy_ref[...]
            acc_sm[1] += w * jnp.sum(gx * gx)
            acc_sm[2] += w * jnp.sum(gy * gy)
            six = sx_ref[pl.ds(bi, 1), :]
            sjx = sx_ref[pl.ds(bj, 1), :]
            siy = sy_ref[pl.ds(bi, 1), :]
            sjy = sy_ref[pl.ds(bj, 1), :]
            gsx = jax.lax.dot_general(six, gx, dimension_numbers=_ROW_BY_MAT,
                                      preferred_element_type=jnp.float32)
            gsy = jax.lax.dot_general(siy, gy, dimension_numbers=_ROW_BY_MAT,
                                      preferred_element_type=jnp.float32)
            acc_sm[3] += w * jnp.sum(gsx * sjx)
            acc_sm[4] += w * jnp.sum(gsy * sjy)

        # Global finalize on the very last grid step.
        @pl.when(jnp.logical_and(p == n_p - 1, k == n_k - 1))
        def _finalize():
            inv_loss = inv_coeff * (acc_sm[0] / (B * D))

            def var_and_cov(s_ref, ss_ref, sum_g2, sgs):
                s = s_ref[...]                       # [n_dblk, tile_d] == all D dims
                css = ss_ref[...] - s * s * inv_B
                var = css * inv_Bm1
                std = jnp.sqrt(jnp.maximum(var, 0.0))
                var_l = jnp.sum(jnp.maximum(gamma - std, 0.0)) / D
                sum_s2 = jnp.sum(s * s)
                sum_gc2 = sum_g2 - 2.0 * inv_B * sgs + (sum_s2 * sum_s2) * inv_B * inv_B
                sum_cov2 = sum_gc2 * inv_Bm1 * inv_Bm1
                cov_l = (sum_cov2 - jnp.sum(var * var)) / D
                return var_l, cov_l

            vx, cx = var_and_cov(sx_ref, sxx_ref, acc_sm[1], acc_sm[3])
            vy, cy = var_and_cov(sy_ref, syy_ref, acc_sm[2], acc_sm[4])
            var_loss = var_coeff * (vx + vy) * 0.5
            cov_loss = cov_coeff * (cx + cy) * 0.5
            o_ref[0] = inv_loss + var_loss + cov_loss
            o_ref[1] = inv_loss
            o_ref[2] = var_loss
            o_ref[3] = cov_loss

    return kernel


def _vicreg_tiled(x, y, inv_coeff, var_coeff, cov_coeff, gamma,
                  tile_b, tile_d, gram_dtype):
    B, D = x.shape
    itemsize = max(x.dtype.itemsize, y.dtype.itemsize)

    if tile_d is None:
        for cand in (512, 256, 128):
            if D % cand == 0:
                tile_d = cand
                break
    assert tile_d is not None and D % tile_d == 0 and tile_d % 128 == 0, \
        f"tile_d must divide D={D} and be a multiple of 128"
    n_dblk = D // tile_d
    n_pairs = n_dblk * (n_dblk + 1) // 2

    scratch_bytes = (2 * tile_d * tile_d * 4                       # Gram blocks
                     + 4 * _round_up(n_dblk, 8) * tile_d * 4)      # per-dim sums
    in_bytes_per_row = 4 * 2 * tile_d * itemsize                    # 4 streams x 2 bufs
    if tile_b is None:
        tile_b = _pick_tile_b(B, in_bytes_per_row, 32 * _MIB)
    assert B % tile_b == 0, f"tile_b={tile_b} must divide B={B}"
    need = scratch_bytes + tile_b * in_bytes_per_row
    vmem_limit = int(min(max(need + 16 * _MIB, 32 * _MIB), 112 * _MIB))
    n_b = B // tile_b

    # Upper-triangle pair list, row-major: (0,0),(0,1),...,(0,n-1),(1,1),...
    bi_list, bj_list = [], []
    for i in range(n_dblk):
        for j in range(i, n_dblk):
            bi_list.append(i)
            bj_list.append(j)
    bi_arr = jnp.asarray(bi_list, jnp.int32)
    bj_arr = jnp.asarray(bj_list, jnp.int32)

    def xi_map(p, k, bi, bj): return (k, bi[p])
    def xj_map(p, k, bi, bj): return (k, bj[p])

    kernel = _make_tiled_kernel(float(inv_coeff), float(var_coeff),
                                float(cov_coeff), float(gamma), B, D, gram_dtype)
    return pl.pallas_call(
        kernel,
        out_shape=jax.ShapeDtypeStruct((4,), jnp.float32),
        grid_spec=pltpu.PrefetchScalarGridSpec(
            num_scalar_prefetch=2,
            grid=(n_pairs, n_b),
            in_specs=[
                pl.BlockSpec((tile_b, tile_d), xi_map),   # x, slice bi
                pl.BlockSpec((tile_b, tile_d), xj_map),   # x, slice bj
                pl.BlockSpec((tile_b, tile_d), xi_map),   # y, slice bi
                pl.BlockSpec((tile_b, tile_d), xj_map),   # y, slice bj
            ],
            out_specs=pl.BlockSpec(memory_space=pltpu.SMEM),
            scratch_shapes=[
                pltpu.VMEM((tile_d, tile_d), jnp.float32),     # Gram block X
                pltpu.VMEM((tile_d, tile_d), jnp.float32),     # Gram block Y
                pltpu.VMEM((n_dblk, tile_d), jnp.float32),     # sum(x) per dim
                pltpu.VMEM((n_dblk, tile_d), jnp.float32),     # sum(y) per dim
                pltpu.VMEM((n_dblk, tile_d), jnp.float32),     # sum(x^2) per dim
                pltpu.VMEM((n_dblk, tile_d), jnp.float32),     # sum(y^2) per dim
                pltpu.SMEM((8,), jnp.float32),                 # scalar accumulators
            ],
        ),
        compiler_params=pltpu.CompilerParams(
            dimension_semantics=("arbitrary", "arbitrary"),
            vmem_limit_bytes=vmem_limit),
    )(bi_arr, bj_arr, x, x, y, y)


# --------------------------------------------------------------------------
# Public wrapper
# --------------------------------------------------------------------------
def vicreg_loss(x, y, inv_coeff=25.0, var_coeff=15.0, cov_coeff=1.0, gamma=1.0,
                *, tile_b=None, tile_d=None, force_tiled=False, gram_in_bf16=False):
    """Pallas-backed VICReg loss. x, y: [B, D].  Returns (loss, inv, var, cov).

    gram_in_bf16=True casts the Gram matmul operands to bf16 (f32 accumulate)
    for MXU peak throughput; keep False when bit-tight agreement with an f32
    reference is required.
    """
    assert x.shape == y.shape and x.ndim == 2
    B, D = x.shape
    assert B >= 2, "VICReg needs batch_size >= 2 (unbiased std divides by B-1)"

    gram_dtype = jnp.bfloat16 if gram_in_bf16 else jnp.float32
    use_tiled = force_tiled or (2 * D * D * 4 > _MONOLITHIC_GRAM_BYTES_MAX)
    if use_tiled and D % 128 != 0:
        if force_tiled:
            raise NotImplementedError("tiled VICReg path needs D % 128 == 0")
        use_tiled = False  # TODO(synk): pad ragged D instead of risking VMEM pressure.

    if use_tiled:
        out = _vicreg_tiled(x, y, inv_coeff, var_coeff, cov_coeff, gamma,
                            tile_b, tile_d, gram_dtype)
    else:
        out = _vicreg_monolithic(x, y, inv_coeff, var_coeff, cov_coeff, gamma,
                                 tile_b, gram_dtype)
    return out[0], out[1], out[2], out[3]


# --------------------------------------------------------------------------
# Pure-JAX reference (mirrors the PyTorch module, two-pass centering)
# --------------------------------------------------------------------------
def _reference_vicreg(x, y, inv_coeff=25.0, var_coeff=15.0, cov_coeff=1.0, gamma=1.0):
    x = x.astype(jnp.float32)
    y = y.astype(jnp.float32)
    B, D = x.shape

    inv = inv_coeff * jnp.mean((x - y) ** 2)

    def var_l(z):
        zc = z - z.mean(axis=0)
        std = jnp.sqrt(jnp.sum(zc * zc, axis=0) / (B - 1))
        return jnp.mean(jnp.maximum(gamma - std, 0.0))

    var = var_coeff * (var_l(x) + var_l(y)) / 2

    def cov_l(z):
        zc = z - z.mean(axis=0)
        cov = zc.T @ zc / (B - 1)
        cov = cov * (1.0 - jnp.eye(D, dtype=cov.dtype))
        return jnp.sum(cov ** 2) / D

    cov = cov_coeff * (cov_l(x) + cov_l(y)) / 2
    return inv + var + cov, inv, var, cov


if __name__ == "__main__":
    import numpy as np

    key = jax.random.PRNGKey(0)
    k1, k2, k3, k4 = jax.random.split(key, 4)

    # --- monolithic path (exercises the multi-step batch-accumulator pipeline)
    B, D = 16, 32
    x = jax.random.normal(k1, (B, D), dtype=jnp.float32)
    y = jax.random.normal(k2, (B, D), dtype=jnp.float32)
    out = jax.block_until_ready(vicreg_loss(x, y, tile_b=8))
    ref = _reference_vicreg(x, y)
    np.testing.assert_allclose(
        np.array([float(v) for v in out], dtype=np.float32),
        np.array([float(r) for r in ref], dtype=np.float32),
        rtol=2e-4, atol=2e-5)

    # --- D-tiled path (symmetric upper-triangle Gram blocks, small forced tiles)
    B2, D2 = 32, 256
    x2 = jax.random.normal(k3, (B2, D2), dtype=jnp.float32)
    y2 = jax.random.normal(k4, (B2, D2), dtype=jnp.float32)
    out2 = jax.block_until_ready(
        vicreg_loss(x2, y2, tile_b=16, tile_d=128, force_tiled=True))
    ref2 = _reference_vicreg(x2, y2)
    np.testing.assert_allclose(
        np.array([float(v) for v in out2], dtype=np.float32),
        np.array([float(r) for r in ref2], dtype=np.float32),
        rtol=2e-4, atol=2e-5)

    print("KERNEL_OK")
</pallas_src>

<mosaic_0001>
module attributes {stable_mosaic.version = 11 : i64} {
  func.func @kernel(%arg0: i32, %arg1: memref<8x32xf32, #tpu.memory_space<vmem>>, %arg2: memref<8x32xf32, #tpu.memory_space<vmem>>, %arg3: memref<4xf32, #tpu.memory_space<smem>>, %arg4: memref<1x32xf32, #tpu.memory_space<vmem>>, %arg5: memref<1x32xf32, #tpu.memory_space<vmem>>, %arg6: memref<1x32xf32, #tpu.memory_space<vmem>>, %arg7: memref<1x32xf32, #tpu.memory_space<vmem>>, %arg8: memref<1x32xf32, #tpu.memory_space<vmem>>, %arg9: memref<32x32xf32, #tpu.memory_space<vmem>>, %arg10: memref<32x32xf32, #tpu.memory_space<vmem>>) attributes {dimension_semantics = [#tpu.dimension_semantics<arbitrary>], iteration_bounds = array<i64: 2>, scalar_prefetch = 0 : i64, scratch_operands = 7 : i64, tpu.core_type = #tpu.core_type<tc>, window_params = [{transform_indices = @transform_0, window_bounds = array<i64: 8, 32>}, {transform_indices = @transform_1, window_bounds = array<i64: 8, 32>}, {transform_indices = @transform_2, window_bounds = array<i64: 4>}]} {
    %c0_i32 = arith.constant 0 : i32
    %0 = arith.cmpi eq, %arg0, %c0_i32 : i32
    %1 = arith.extui %0 : i1 to i32
    %c0_i32_0 = arith.constant 0 : i32
    %2 = arith.cmpi ne, %1, %c0_i32_0 : i32
    scf.if %2 {
      %cst_39 = arith.constant 0.000000e+00 : f32
      %45 = vector.broadcast %cst_39 : f32 to vector<1x32xf32>
      %c0_40 = arith.constant 0 : index
      %c0_41 = arith.constant 0 : index
      %46 = vector.load %arg4[%c0_40, %c0_41] : memref<1x32xf32, #tpu.memory_space<vmem>>, vector<1x32xf32>
      tpu.vector_store %arg4[%c0_40, %c0_41], %45 {strides = array<i32>} : memref<1x32xf32, #tpu.memory_space<vmem>>, vector<1x32xf32>,
      %cst_42 = arith.constant 0.000000e+00 : f32
      %47 = vector.broadcast %cst_42 : f32 to vector<1x32xf32>
      %c0_43 = arith.constant 0 : index
      %c0_44 = arith.constant 0 : index
      %48 = vector.load %arg5[%c0_43, %c0_44] : memref<1x32xf32, #tpu.memory_space<vmem>>, vector<1x32xf32>
      tpu.vector_store %arg5[%c0_43, %c0_44], %47 {strides = array<i32>} : memref<1x32xf32, #tpu.memory_space<vmem>>, vector<1x32xf32>,
      %cst_45 = arith.constant 0.000000e+00 : f32
      %49 = vector.broadcast %cst_45 : f32 to vector<1x32xf32>
      %c0_46 = arith.constant 0 : index
      %c0_47 = arith.constant 0 : index
      %50 = vector.load %arg6[%c0_46, %c0_47] : memref<1x32xf32, #tpu.memory_space<vmem>>, vector<1x32xf32>
      tpu.vector_store %arg6[%c0_46, %c0_47], %49 {strides = array<i32>} : memref<1x32xf32, #tpu.memory_space<vmem>>, vector<1x32xf32>,
      %cst_48 = arith.constant 0.000000e+00 : f32
      %51 = vector.broadcast %cst_48 : f32 to vector<1x32xf32>
      %c0_49 = arith.constant 0 : index
      %c0_50 = arith.constant 0 : index
      %52 = vector.load %arg7[%c0_49, %c0_50] : memref<1x32xf32, #tpu.memory_space<vmem>>, vector<1x32xf32>
      tpu.vector_store %arg7[%c0_49, %c0_50], %51 {strides = array<i32>} : memref<1x32xf32, #tpu.memory_space<vmem>>, vector<1x32xf32>,
      %cst_51 = arith.constant 0.000000e+00 : f32
      %53 = vector.broadcast %cst_51 : f32 to vector<1x32xf32>
      %c0_52 = arith.constant 0 : index
      %c0_53 = arith.constant 0 : index
      %54 = vector.load %arg8[%c0_52, %c0_53] : memref<1x32xf32, #tpu.memory_space<vmem>>, vector<1x32xf32>
      tpu.vector_store %arg8[%c0_52, %c0_53], %53 {strides = array<i32>} : memref<1x32xf32, #tpu.memory_space<vmem>>, vector<1x32xf32>,
      %cst_54 = arith.constant 0.000000e+00 : f32
      %55 = vector.broadcast %cst_54 : f32 to vector<32x32xf32>
      %c0_55 = arith.constant 0 : index
      %c0_56 = arith.constant 0 : index
      %56 = vector.load %arg9[%c0_55, %c0_56] : memref<32x32xf32, #tpu.memory_space<vmem>>, vector<32x32xf32>
      tpu.vector_store %arg9[%c0_55, %c0_56], %55 {strides = array<i32>} : memref<32x32xf32, #tpu.memory_space<vmem>>, vector<32x32xf32>,
      %cst_57 = arith.constant 0.000000e+00 : f32
      %57 = vector.broadcast %cst_57 : f32 to vector<32x32xf32>
      %c0_58 = arith.constant 0 : index
      %c0_59 = arith.constant 0 : index
      %58 = vector.load %arg10[%c0_58, %c0_59] : memref<32x32xf32, #tpu.memory_space<vmem>>, vector<32x32xf32>
      tpu.vector_store %arg10[%c0_58, %c0_59], %57 {strides = array<i32>} : memref<32x32xf32, #tpu.memory_space<vmem>>, vector<32x32xf32>,
    } else {
    }
    %c0 = arith.constant 0 : index
    %c0_1 = arith.constant 0 : index
    %3 = vector.load %arg1[%c0, %c0_1] : memref<8x32xf32, #tpu.memory_space<vmem>>, vector<8x32xf32>
    %c0_2 = arith.constant 0 : index
    %c0_3 = arith.constant 0 : index
    %4 = vector.load %arg2[%c0_2, %c0_3] : memref<8x32xf32, #tpu.memory_space<vmem>>, vector<8x32xf32>
    %5 = arith.subf %3, %4 : vector<8x32xf32>
    %c0_4 = arith.constant 0 : index
    %c0_5 = arith.constant 0 : index
    %6 = vector.load %arg4[%c0_4, %c0_5] : memref<1x32xf32, #tpu.memory_space<vmem>>, vector<1x32xf32>
    %7 = arith.mulf %5, %5 : vector<8x32xf32>
    %cst = arith.constant dense<0.000000e+00> : vector<32xf32>
    %8 = vector.multi_reduction <add>, %7, %cst [0] : vector<8x32xf32> to vector<32xf32>
    %9 = vector.shape_cast %8 : vector<32xf32> to vector<1x32xf32>
    %10 = arith.addf %6, %9 : vector<1x32xf32>
    %c0_6 = arith.constant 0 : index
    %c0_7 = arith.constant 0 : index
    %11 = vector.load %arg4[%c0_6, %c0_7] : memref<1x32xf32, #tpu.memory_space<vmem>>, vector<1x32xf32>
    tpu.vector_store %arg4[%c0_6, %c0_7], %10 {strides = array<i32>} : memref<1x32xf32, #tpu.memory_space<vmem>>, vector<1x32xf32>,
    %c0_8 = arith.constant 0 : index
    %c0_9 = arith.constant 0 : index
    %12 = vector.load %arg5[%c0_8, %c0_9] : memref<1x32xf32, #tpu.memory_space<vmem>>, vector<1x32xf32>
    %cst_10 = arith.constant dense<0.000000e+00> : vector<32xf32>
    %13 = vector.multi_reduction <add>, %3, %cst_10 [0] : vector<8x32xf32> to vector<32xf32>
    %14 = vector.shape_cast %13 : vector<32xf32> to vector<1x32xf32>
    %15 = arith.addf %12, %14 : vector<1x32xf32>
    %c0_11 = arith.constant 0 : index
    %c0_12 = arith.constant 0 : index
    %16 = vector.load %arg5[%c0_11, %c0_12] : memref<1x32xf32, #tpu.memory_space<vmem>>, vector<1x32xf32>
    tpu.vector_store %arg5[%c0_11, %c0_12], %15 {strides = array<i32>} : memref<1x32xf32, #tpu.memory_space<vmem>>, vector<1x32xf32>,
    %c0_13 = arith.constant 0 : index
    %c0_14 = arith.constant 0 : index
    %17 = vector.load %arg6[%c0_13, %c0_14] : memref<1x32xf32, #tpu.memory_space<vmem>>, vector<1x32xf32>
    %cst_15 = arith.constant dense<0.000000e+00> : vector<32xf32>
    %18 = vector.multi_reduction <add>, %4, %cst_15 [0] : vector<8x32xf32> to vector<32xf32>
    %19 = vector.shape_cast %18 : vector<32xf32> to vector<1x32xf32>
    %20 = arith.addf %17, %19 : vector<1x32xf32>
    %c0_16 = arith.constant 0 : index
    %c0_17 = arith.constant 0 : index
    %21 = vector.load %arg6[%c0_16, %c0_17] : memref<1x32xf32, #tpu.memory_space<vmem>>, vector<1x32xf32>
    tpu.vector_store %arg6[%c0_16, %c0_17], %20 {strides = array<i32>} : memref<1x32xf32, #tpu.memory_space<vmem>>, vector<1x32xf32>,
    %c0_18 = arith.constant 0 : index
    %c0_19 = arith.constant 0 : index
    %22 = vector.load %arg7[%c0_18, %c0_19] : memref<1x32xf32, #tpu.memory_space<vmem>>, vector<1x32xf32>
    %23 = arith.mulf %3, %3 : vector<8x32xf32>
    %cst_20 = arith.constant dense<0.000000e+00> : vector<32xf32>
    %24 = vector.multi_reduction <add>, %23, %cst_20 [0] : vector<8x32xf32> to vector<32xf32>
    %25 = vector.shape_cast %24 : vector<32xf32> to vector<1x32xf32>
    %26 = arith.addf %22, %25 : vector<1x32xf32>
    %c0_21 = arith.constant 0 : index
    %c0_22 = arith.constant 0 : index
    %27 = vector.load %arg7[%c0_21, %c0_22] : memref<1x32xf32, #tpu.memory_space<vmem>>, vector<1x32xf32>
    tpu.vector_store %arg7[%c0_21, %c0_22], %26 {strides = array<i32>} : memref<1x32xf32, #tpu.memory_space<vmem>>, vector<1x32xf32>,
    %c0_23 = arith.constant 0 : index
    %c0_24 = arith.constant 0 : index
    %28 = vector.load %arg8[%c0_23, %c0_24] : memref<1x32xf32, #tpu.memory_space<vmem>>, vector<1x32xf32>
    %29 = arith.mulf %4, %4 : vector<8x32xf32>
    %cst_25 = arith.constant dense<0.000000e+00> : vector<32xf32>
    %30 = vector.multi_reduction <add>, %29, %cst_25 [0] : vector<8x32xf32> to vector<32xf32>
    %31 = vector.shape_cast %30 : vector<32xf32> to vector<1x32xf32>
    %32 = arith.addf %28, %31 : vector<1x32xf32>
    %c0_26 = arith.constant 0 : index
    %c0_27 = arith.constant 0 : index
    %33 = vector.load %arg8[%c0_26, %c0_27] : memref<1x32xf32, #tpu.memory_space<vmem>>, vector<1x32xf32>
    tpu.vector_store %arg8[%c0_26, %c0_27], %32 {strides = array<i32>} : memref<1x32xf32, #tpu.memory_space<vmem>>, vector<1x32xf32>,
    %c0_28 = arith.constant 0 : index
    %c0_29 = arith.constant 0 : index
    %34 = vector.load %arg9[%c0_28, %c0_29] : memref<32x32xf32, #tpu.memory_space<vmem>>, vector<32x32xf32>
    %cst_30 = arith.constant dense<0.000000e+00> : vector<32x32xf32>
    %35 = tpu.matmul %3, %3, %cst_30 {dimension_numbers = #tpu.dot_dimension_numbers<[0], [0], [1], [1], [0, 1, 1, 1], [], []>} : vector<8x32xf32>, vector<8x32xf32>, vector<32x32xf32> -> vector<32x32xf32>
    %36 = arith.addf %34, %35 : vector<32x32xf32>
    %c0_31 = arith.constant 0 : index
    %c0_32 = arith.constant 0 : index
    %37 = vector.load %arg9[%c0_31, %c0_32] : memref<32x32xf32, #tpu.memory_space<vmem>>, vector<32x32xf32>
    tpu.vector_store %arg9[%c0_31, %c0_32], %36 {strides = array<i32>} : memref<32x32xf32, #tpu.memory_space<vmem>>, vector<32x32xf32>,
    %c0_33 = arith.constant 0 : index
    %c0_34 = arith.constant 0 : index
    %38 = vector.load %arg10[%c0_33, %c0_34] : memref<32x32xf32, #tpu.memory_space<vmem>>, vector<32x32xf32>
    %cst_35 = arith.constant dense<0.000000e+00> : vector<32x32xf32>
    %39 = tpu.matmul %4, %4, %cst_35 {dimension_numbers = #tpu.dot_dimension_numbers<[0], [0], [1], [1], [0, 1, 1, 1], [], []>} : vector<8x32xf32>, vector<8x32xf32>, vector<32x32xf32> -> vector<32x32xf32>
    %40 = arith.addf %38, %39 : vector<32x32xf32>
    %c0_36 = arith.constant 0 : index
    %c0_37 = arith.constant 0 : index
    %41 = vector.load %arg10[%c0_36, %c0_37] : memref<32x32xf32, #tpu.memory_space<vmem>>, vector<32x32xf32>
    tpu.vector_store %arg10[%c0_36, %c0_37], %40 {strides = array<i32>} : memref<32x32xf32, #tpu.memory_space<vmem>>, vector<32x32xf32>,
    %c1_i32 = arith.constant 1 : i32
    %42 = arith.cmpi eq, %arg0, %c1_i32 : i32
    %43 = arith.extui %42 : i1 to i32
    %c0_i32_38 = arith.constant 0 : i32
    %44 = arith.cmpi ne, %43, %c0_i32_38 : i32
    scf.if %44 {
      %c0_39 = arith.constant 0 : index
      %c0_40 = arith.constant 0 : index
      %45 = vector.load %arg4[%c0_39, %c0_40] : memref<1x32xf32, #tpu.memory_space<vmem>>, vector<1x32xf32>
      %46 = vector.shape_cast %45 : vector<1x32xf32> to vector<1x1x32xf32>
      %cst_41 = arith.constant dense<0.000000e+00> : vector<1xf32>
      %47 = vector.multi_reduction <add>, %46, %cst_41 [1, 2] : vector<1x1x32xf32> to vector<1xf32>
      %48 = vector.shape_cast %47 : vector<1xf32> to vector<1x1x1xf32>
      %49 = vector.extract %48[0, 0, 0] : f32 from vector<1x1x1xf32>
      %cst_42 = arith.constant 5.120000e+02 : f32
      %50 = arith.divf %49, %cst_42 : f32
      %cst_43 = arith.constant 2.500000e+01 : f32
      %51 = arith.mulf %cst_43, %50 : f32
      %c0_44 = arith.constant 0 : index
      %c0_45 = arith.constant 0 : index
      %52 = vector.load %arg5[%c0_44, %c0_45] : memref<1x32xf32, #tpu.memory_space<vmem>>, vector<1x32xf32>
      %c0_46 = arith.constant 0 : index
      %c0_47 = arith.constant 0 : index
      %53 = vector.load %arg7[%c0_46, %c0_47] : memref<1x32xf32, #tpu.memory_space<vmem>>, vector<1x32xf32>
      %54 = arith.mulf %52, %52 : vector<1x32xf32>
      %cst_48 = arith.constant 6.250000e-02 : f32
      %55 = vector.broadcast %cst_48 : f32 to vector<1x32xf32>
      %56 = arith.mulf %54, %55 : vector<1x32xf32>
      %57 = arith.subf %53, %56 : vector<1x32xf32>
      %cst_49 = arith.constant 0.0666666701 : f32
      %58 = vector.broadcast %cst_49 : f32 to vector<1x32xf32>
      %59 = arith.mulf %57, %58 : vector<1x32xf32>
      %cst_50 = arith.constant 0.000000e+00 : f32
      %60 = vector.broadcast %cst_50 : f32 to vector<1x32xf32>
      %61 = arith.maximumf %59, %60 : vector<1x32xf32>
      %62 = math.sqrt %61 : vector<1x32xf32>
      %cst_51 = arith.constant 1.000000e+00 : f32
      %63 = vector.broadcast %cst_51 : f32 to vector<1x32xf32>
      %64 = arith.subf %63, %62 : vector<1x32xf32>
      %cst_52 = arith.constant 0.000000e+00 : f32
      %65 = vector.broadcast %cst_52 : f32 to vector<1x32xf32>
      %66 = arith.maximumf %64, %65 : vector<1x32xf32>
      %67 = vector.shape_cast %66 : vector<1x32xf32> to vector<1x1x32xf32>
      %cst_53 = arith.constant dense<0.000000e+00> : vector<1xf32>
      %68 = vector.multi_reduction <add>, %67, %cst_53 [1, 2] : vector<1x1x32xf32> to vector<1xf32>
      %69 = vector.shape_cast %68 : vector<1xf32> to vector<1x1x1xf32>
      %70 = vector.extract %69[0, 0, 0] : f32 from vector<1x1x1xf32>
      %cst_54 = arith.constant 3.200000e+01 : f32
      %71 = arith.divf %70, %cst_54 : f32
      %c0_55 = arith.constant 0 : index
      %c0_56 = arith.constant 0 : index
      %72 = vector.load %arg9[%c0_55, %c0_56] : memref<32x32xf32, #tpu.memory_space<vmem>>, vector<32x32xf32>
      %73 = arith.mulf %72, %72 : vector<32x32xf32>
      %74 = vector.shape_cast %73 : vector<32x32xf32> to vector<1x32x32xf32>
      %cst_57 = arith.constant dense<0.000000e+00> : vector<1xf32>
      %75 = vector.multi_reduction <add>, %74, %cst_57 [1, 2] : vector<1x32x32xf32> to vector<1xf32>
      %76 = vector.shape_cast %75 : vector<1xf32> to vector<1x1x1xf32>
      %77 = vector.extract %76[0, 0, 0] : f32 from vector<1x1x1xf32>
      %cst_58 = arith.constant dense<0.000000e+00> : vector<1x32xf32>
      %78 = tpu.matmul %52, %72, %cst_58 {dimension_numbers = #tpu.dot_dimension_numbers<[1], [0], [0], [1], [0, 0, 1, 1], [], []>} : vector<1x32xf32>, vector<32x32xf32>, vector<1x32xf32> -> vector<1x32xf32>
      %79 = arith.mulf %78, %52 : vector<1x32xf32>
      %80 = vector.shape_cast %79 : vector<1x32xf32> to vector<1x1x32xf32>
      %cst_59 = arith.constant dense<0.000000e+00> : vector<1xf32>
      %81 = vector.multi_reduction <add>, %80, %cst_59 [1, 2] : vector<1x1x32xf32> to vector<1xf32>
      %82 = vector.shape_cast %81 : vector<1xf32> to vector<1x1x1xf32>
      %83 = vector.extract %82[0, 0, 0] : f32 from vector<1x1x1xf32>
      %84 = arith.mulf %52, %52 : vector<1x32xf32>
      %85 = vector.shape_cast %84 : vector<1x32xf32> to vector<1x1x32xf32>
      %cst_60 = arith.constant dense<0.000000e+00> : vector<1xf32>
      %86 = vector.multi_reduction <add>, %85, %cst_60 [1, 2] : vector<1x1x32xf32> to vector<1xf32>
      %87 = vector.shape_cast %86 : vector<1xf32> to vector<1x1x1xf32>
      %88 = vector.extract %87[0, 0, 0] : f32 from vector<1x1x1xf32>
      %cst_61 = arith.constant 1.250000e-01 : f32
      %89 = arith.mulf %cst_61, %83 : f32
      %90 = arith.subf %77, %89 : f32
      %91 = arith.mulf %88, %88 : f32
      %cst_62 = arith.constant 6.250000e-02 : f32
      %92 = arith.mulf %91, %cst_62 : f32
      %cst_63 = arith.constant 6.250000e-02 : f32
      %93 = arith.mulf %92, %cst_63 : f32
      %94 = arith.addf %90, %93 : f32
      %cst_64 = arith.constant 0.0666666701 : f32
      %95 = arith.mulf %94, %cst_64 : f32
      %cst_65 = arith.constant 0.0666666701 : f32
      %96 = arith.mulf %95, %cst_65 : f32
      %97 = arith.mulf %59, %59 : vector<1x32xf32>
      %98 = vector.shape_cast %97 : vector<1x32xf32> to vector<1x1x32xf32>
      %cst_66 = arith.constant dense<0.000000e+00> : vector<1xf32>
      %99 = vector.multi_reduction <add>, %98, %cst_66 [1, 2] : vector<1x1x32xf32> to vector<1xf32>
      %100 = vector.shape_cast %99 : vector<1xf32> to vector<1x1x1xf32>
      %101 = vector.extract %100[0, 0, 0] : f32 from vector<1x1x1xf32>
      %102 = arith.subf %96, %101 : f32
      %cst_67 = arith.constant 3.200000e+01 : f32
      %103 = arith.divf %102, %cst_67 : f32
      %c0_68 = arith.constant 0 : index
      %c0_69 = arith.constant 0 : index
      %104 = vector.load %arg6[%c0_68, %c0_69] : memref<1x32xf32, #tpu.memory_space<vmem>>, vector<1x32xf32>
      %c0_70 = arith.constant 0 : index
      %c0_71 = arith.constant 0 : index
      %105 = vector.load %arg8[%c0_70, %c0_71] : memref<1x32xf32, #tpu.memory_space<vmem>>, vector<1x32xf32>
      %106 = arith.mulf %104, %104 : vector<1x32xf32>
      %cst_72 = arith.constant 6.250000e-02 : f32
      %107 = vector.broadcast %cst_72 : f32 to vector<1x32xf32>
      %108 = arith.mulf %106, %107 : vector<1x32xf32>
      %109 = arith.subf %105, %108 : vector<1x32xf32>
      %cst_73 = arith.constant 0.0666666701 : f32
      %110 = vector.broadcast %cst_73 : f32 to vector<1x32xf32>
      %111 = arith.mulf %109, %110 : vector<1x32xf32>
      %cst_74 = arith.constant 0.000000e+00 : f32
      %112 = vector.broadcast %cst_74 : f32 to vector<1x32xf32>
      %113 = arith.maximumf %111, %112 : vector<1x32xf32>
      %114 = math.sqrt %113 : vector<1x32xf32>
      %cst_75 = arith.constant 1.000000e+00 : f32
      %115 = vector.broadcast %cst_75 : f32 to vector<1x32xf32>
      %116 = arith.subf %115, %114 : vector<1x32xf32>
      %cst_76 = arith.constant 0.000000e+00 : f32
      %117 = vector.broadcast %cst_76 : f32 to vector<1x32xf32>
      %118 = arith.maximumf %116, %117 : vector<1x32xf32>
      %119 = vector.shape_cast %118 : vector<1x32xf32> to vector<1x1x32xf32>
      %cst_77 = arith.constant dense<0.000000e+00> : vector<1xf32>
      %120 = vector.multi_reduction <add>, %119, %cst_77 [1, 2] : vector<1x1x32xf32> to vector<1xf32>
      %121 = vector.shape_cast %120 : vector<1xf32> to vector<1x1x1xf32>
      %122 = vector.extract %121[0, 0, 0] : f32 from vector<1x1x1xf32>
      %cst_78 = arith.constant 3.200000e+01 : f32
      %123 = arith.divf %122, %cst_78 : f32
      %c0_79 = arith.constant 0 : index
      %c0_80 = arith.constant 0 : index
      %124 = vector.load %arg10[%c0_79, %c0_80] : memref<32x32xf32, #tpu.memory_space<vmem>>, vector<32x32xf32>
      %125 = arith.mulf %124, %124 : vector<32x32xf32>
      %126 = vector.shape_cast %125 : vector<32x32xf32> to vector<1x32x32xf32>
      %cst_81 = arith.constant dense<0.000000e+00> : vector<1xf32>
      %127 = vector.multi_reduction <add>, %126, %cst_81 [1, 2] : vector<1x32x32xf32> to vector<1xf32>
      %128 = vector.shape_cast %127 : vector<1xf32> to vector<1x1x1xf32>
      %129 = vector.extract %128[0, 0, 0] : f32 from vector<1x1x1xf32>
      %cst_82 = arith.constant dense<0.000000e+00> : vector<1x32xf32>
      %130 = tpu.matmul %104, %124, %cst_82 {dimension_numbers = #tpu.dot_dimension_numbers<[1], [0], [0], [1], [0, 0, 1, 1], [], []>} : vector<1x32xf32>, vector<32x32xf32>, vector<1x32xf32> -> vector<1x32xf32>
      %131 = arith.mulf %130, %104 : vector<1x32xf32>
      %132 = vector.shape_cast %131 : vector<1x32xf32> to vector<1x1x32xf32>
      %cst_83 = arith.constant dense<0.000000e+00> : vector<1xf32>
      %133 = vector.multi_reduction <add>, %132, %cst_83 [1, 2] : vector<1x1x32xf32> to vector<1xf32>
      %134 = vector.shape_cast %133 : vector<1xf32> to vector<1x1x1xf32>
      %135 = vector.extract %134[0, 0, 0] : f32 from vector<1x1x1xf32>
      %136 = arith.mulf %104, %104 : vector<1x32xf32>
      %137 = vector.shape_cast %136 : vector<1x32xf32> to vector<1x1x32xf32>
      %cst_84 = arith.constant dense<0.000000e+00> : vector<1xf32>
      %138 = vector.multi_reduction <add>, %137, %cst_84 [1, 2] : vector<1x1x32xf32> to vector<1xf32>
      %139 = vector.shape_cast %138 : vector<1xf32> to vector<1x1x1xf32>
      %140 = vector.extract %139[0, 0, 0] : f32 from vector<1x1x1xf32>
      %cst_85 = arith.constant 1.250000e-01 : f32
      %141 = arith.mulf %cst_85, %135 : f32
      %142 = arith.subf %129, %141 : f32
      %143 = arith.mulf %140, %140 : f32
      %cst_86 = arith.constant 6.250000e-02 : f32
      %144 = arith.mulf %143, %cst_86 : f32
      %cst_87 = arith.constant 6.250000e-02 : f32
      %145 = arith.mulf %144, %cst_87 : f32
      %146 = arith.addf %142, %145 : f32
      %cst_88 = arith.constant 0.0666666701 : f32
      %147 = arith.mulf %146, %cst_88 : f32
      %cst_89 = arith.constant 0.0666666701 : f32
      %148 = arith.mulf %147, %cst_89 : f32
      %149 = arith.mulf %111, %111 : vector<1x32xf32>
      %150 = vector.shape_cast %149 : vector<1x32xf32> to vector<1x1x32xf32>
      %cst_90 = arith.constant dense<0.000000e+00> : vector<1xf32>
      %151 = vector.multi_reduction <add>, %150, %cst_90 [1, 2] : vector<1x1x32xf32> to vector<1xf32>
      %152 = vector.shape_cast %151 : vector<1xf32> to vector<1x1x1xf32>
      %153 = vector.extract %152[0, 0, 0] : f32 from vector<1x1x1xf32>
      %154 = arith.subf %148, %153 : f32
      %cst_91 = arith.constant 3.200000e+01 : f32
      %155 = arith.divf %154, %cst_91 : f32
      %156 = arith.addf %71, %123 : f32
      %cst_92 = arith.constant 1.500000e+01 : f32
      %157 = arith.mulf %cst_92, %156 : f32
      %cst_93 = arith.constant 5.000000e-01 : f32
      %158 = arith.mulf %157, %cst_93 : f32
      %159 = arith.addf %103, %155 : f32
      %cst_94 = arith.constant 1.000000e+00 : f32
      %160 = arith.mulf %cst_94, %159 : f32
      %cst_95 = arith.constant 5.000000e-01 : f32
      %161 = arith.mulf %160, %cst_95 : f32
      %162 = arith.addf %51, %158 : f32
      %163 = arith.addf %162, %161 : f32
      %c0_96 = arith.constant 0 : index
      %164 = memref.load %arg3[%c0_96] : memref<4xf32, #tpu.memory_space<smem>>
      memref.store %163, %arg3[%c0_96] : memref<4xf32, #tpu.memory_space<smem>>
      %c1 = arith.constant 1 : index
      %165 = memref.load %arg3[%c1] : memref<4xf32, #tpu.memory_space<smem>>
      memref.store %51, %arg3[%c1] : memref<4xf32, #tpu.memory_space<smem>>
      %c2 = arith.constant 2 : index
      %166 = memref.load %arg3[%c2] : memref<4xf32, #tpu.memory_space<smem>>
      memref.store %158, %arg3[%c2] : memref<4xf32, #tpu.memory_space<smem>>
      %c3 = arith.constant 3 : index
      %167 = memref.load %arg3[%c3] : memref<4xf32, #tpu.memory_space<smem>>
      memref.store %161, %arg3[%c3] : memref<4xf32, #tpu.memory_space<smem>>
    } else {
    }
    return
  }
  func.func @transform_0(%arg0: i32) -> (i32, i32) {
    %c0_i32 = arith.constant 0 : i32
    %c0_i32_0 = arith.constant 0 : i32
    return %arg0, %c0_i32 : i32, i32
  }
  func.func @transform_1(%arg0: i32) -> (i32, i32) {
    %c0_i32 = arith.constant 0 : i32
    %c0_i32_0 = arith.constant 0 : i32
    return %arg0, %c0_i32 : i32, i32
  }
  func.func @transform_2(%arg0: i32) -> i32 {
    %c0_i32 = arith.constant 0 : i32
    %c0_i32_0 = arith.constant 0 : i32
    return %c0_i32 : i32
  }
}

</mosaic_0001>

<llo_original>
// kernel: tpu_custom_call.1
$region0: #{tpu_custom_call.1}
  #allocation0 [shape = 'u32[]', space=smem, size = 0x4, offset = 0x4, fixed_abs, tag = 'smem constant byte address 0x4 - core index']
  #allocation1 [shape = 'u32[72,128]{1,0:T(1,128)}', space=vmem, size = 0x9000, scoped, tag = 'internal scratch']
  #allocation2 [shape = 'f32[1,32]{1,0:T(1,128)}', space=vmem, size = 0x200, scoped, tag = 'scratch operand']
  #allocation3 [shape = 'f32[1,32]{1,0:T(1,128)}', space=vmem, size = 0x200, scoped, tag = 'scratch operand']
  #allocation4 [shape = 'f32[1,32]{1,0:T(1,128)}', space=vmem, size = 0x200, scoped, tag = 'scratch operand']
  #allocation5 [shape = 'f32[1,32]{1,0:T(1,128)}', space=vmem, size = 0x200, scoped, tag = 'scratch operand']
  #allocation6 [shape = 'f32[1,32]{1,0:T(1,128)}', space=vmem, size = 0x200, scoped, tag = 'scratch operand']
  #allocation7 [shape = 'f32[32,32]{1,0:T(8,128)}', space=vmem, size = 0x4000, scoped, tag = 'scratch operand']
  #allocation8 [shape = 'f32[32,32]{1,0:T(8,128)}', space=vmem, size = 0x4000, scoped, tag = 'scratch operand']
  %s0 = inlined_call_operand.hbm [shape: f32[16,32], index: 0, kind: input, shape index: {}]
  %s1 = inlined_call_operand.hbm [shape: f32[16,32], index: 1, kind: input, shape index: {}]
  %s2 = inlined_call_operand.hbm [shape: f32[4], index: 2, kind: output, shape index: {}]
  %s3 = sld [smem:[#allocation0]]
  $region57: #{tpu_custom_call.1} parent=0
    _
  %s5 = ssub.s32 1, %s3
  %s6 = scalar_select 0, %s5, %s3
  $region1: #{tpu_custom_call.1} parent=0
    #allocation9 [shape = 'u8[8192]{0}', space=vmem, size = 0x2000, scoped, tag = 'input window, operand 0']
    #allocation10 [shape = 's32[2]{0}', space=sflag, size = 0x8, scoped, tag = 'scoped memory for tpu_custom_call.1']
    #allocation11 [shape = 's32[2]{0}', space=sflag, size = 0x8, scoped, tag = 'scoped memory for tpu_custom_call.1']
    #allocation12 [shape = 'u8[8192]{0}', space=vmem, size = 0x2000, scoped, tag = 'input window, operand 1']
    #allocation13 [shape = 's32[2]{0}', space=sflag, size = 0x8, scoped, tag = 'scoped memory for tpu_custom_call.1']
    #allocation14 [shape = 'u8[512]{0}', space=smem, size = 0x200, scoped, tag = 'output window, operand 0, single buffered']
    %7 = vsyncpa [#allocation10], 0
    %s8 = scalar_lea.sflag [#allocation10], 1
    %9 = vsyncpa %s8, 0
    %10 = vsyncpa [#allocation13], 0
    %s11 = scalar_lea.sflag [#allocation13], 1
    %12 = vsyncpa %s11, 0
    %13 = vsyncpa [#allocation11], 0
    loop: start=0, step=1, limit=4
    $region2: #{tpu_custom_call.1} parent=1 // loop_pre_header
      _
    $region3: #{tpu_custom_call.1} parent=1 // loop_header
      %s15 = sphi 0, %s19
      %p16 = scmp.ge.s32.totalorder %s15, 4
      %s25 = sphi 0, %s27
      %s28 = sphi 0, %s25
      %s29 = sphi 0, %s28
      %s45 = sphi 0, %s29
      %s51 = sphi 0, %s53
      %s54 = sphi 0, %s51
      %s55 = sphi 0, %s54
      %s71 = sphi 0, %s55
      %s75 = sphi 0, %s75
      %s77 = sphi 0, %s75
      %s78 = sphi 0, %s77
      %s92 = sphi 0, %s78
    $region4: #{tpu_custom_call.1} parent=1 // loop_header_branch
      %18 = sbr.rel (%p16) target = $region8
    $region5: #{tpu_custom_call.1} parent=1 // loop_body
      %s20 = ssub.s32 %s15, 1
      %s21 = ssub.s32 %s15, 2
      %s22 = sadd.s32 %s15, 1
      %s23 = ssub.s32 %s15, %s22
      %p24 = scmp.eq.s32.totalorder %s23, 0
      %s26 = sadd.s32 %s25, 1
      %s27 = scalar_select %p24, %s25, %s26
      %p30 = pneg %p24
      %p31 = scmp.eq.s32.totalorder %s15, 1
      %p32 = por %p30, %p31
      %p33 = scmp.ne.s32.totalorder %s25, %s28
      %p34 = scmp.eq.s32.totalorder %s15, 0
      %p35 = por %p33, %p34
      %p36 = scmp.ne.s32.totalorder %s25, %s28
      %p37 = scmp.eq.s32.totalorder %s20, 1
      %p38 = por %p36, %p37
      %p39 = scmp.ne.s32.totalorder %s28, %s29
      %p40 = scmp.eq.s32.totalorder %s20, 0
      %p41 = por %p39, %p40
      %p42 = scmp.ne.s32.totalorder %s28, %s29
      %p43 = scmp.eq.s32.totalorder %s21, 1
      %p44 = por %p42, %p43
      %p46 = scmp.ne.s32.totalorder %s29, %s45
      %p47 = scmp.eq.s32.totalorder %s21, 0
      %p48 = por %p46, %p47
      %s49 = ssub.s32 %s15, %s22
      %p50 = scmp.eq.s32.totalorder %s49, 0
      %s52 = sadd.s32 %s51, 1
      %s53 = scalar_select %p50, %s51, %s52
      %p56 = pneg %p50
      %p57 = scmp.eq.s32.totalorder %s15, 1
      %p58 = por %p56, %p57
      %p59 = scmp.ne.s32.totalorder %s51, %s54
      %p60 = scmp.eq.s32.totalorder %s15, 0
      %p61 = por %p59, %p60
      %p62 = scmp.ne.s32.totalorder %s51, %s54
      %p63 = scmp.eq.s32.totalorder %s20, 1
      %p64 = por %p62, %p63
      %p65 = scmp.ne.s32.totalorder %s54, %s55
      %p66 = scmp.eq.s32.totalorder %s20, 0
      %p67 = por %p65, %p66
      %p68 = scmp.ne.s32.totalorder %s54, %s55
      %p69 = scmp.eq.s32.totalorder %s21, 1
      %p70 = por %p68, %p69
      %p72 = scmp.ne.s32.totalorder %s55, %s71
      %p73 = scmp.eq.s32.totalorder %s21, 0
      %p74 = por %p72, %p73
      %s76 = sadd.s32 %s75, 1
      %p79 = scmp.eq.s32.totalorder %s15, 1
      %p80 = scmp.ne.s32.totalorder %s75, %s77
      %p81 = scmp.eq.s32.totalorder %s15, 0
      %p82 = por %p80, %p81
      %p83 = scmp.ne.s32.totalorder %s75, %s77
      %p84 = scmp.eq.s32.totalorder %s20, 1
      %p85 = por %p83, %p84
      %p86 = scmp.ne.s32.totalorder %s77, %s78
      %p87 = scmp.eq.s32.totalorder %s20, 0
      %p88 = por %p86, %p87
      %p89 = scmp.ne.s32.totalorder %s77, %s78
      %p90 = scmp.eq.s32.totalorder %s21, 1
      %p91 = por %p89, %p90
      %p93 = scmp.ne.s32.totalorder %s78, %s92
      %p94 = scmp.eq.s32.totalorder %s21, 0
      %p95 = por %p93, %p94
      %p96 = scmp.le.s32.totalorder 1, %s15
      %p97 = scmp.lt.s32.totalorder %s15, 3
      %p98 = pnand %p96, %p97
      %p99 = pneg %p98
      // Predicated region
      $region9: #{tpu_custom_call.1} parent=5 // pred_check
        _
      $region10: #{tpu_custom_call.1} parent=5 // pred_check_branch
        %101 = sbr.rel (%p98) target = $region12
      $region11: #{tpu_custom_call.1} parent=5 // pred_region
        %s102 = ssub.s32 %s15, 1
      $region12: #{tpu_custom_call.1} parent=5 // pred_fallthru
        _
      %p103 = scmp.lt.s32.totalorder %s15, 2
      // Predicated region
      $region13: #{tpu_custom_call.1} parent=5 // pred_check
        %p104 = pneg %p103
      $region14: #{tpu_custom_call.1} parent=5 // pred_check_branch
        %106 = sbr.rel (%p104) target = $region16
      $region15: #{tpu_custom_call.1} parent=5 // pred_region
        // Predicated region
        $region17: #{tpu_custom_call.1} parent=15 // pred_check
          %p107 = pneg %p35
        $region18: #{tpu_custom_call.1} parent=15 // pred_check_branch
          %109 = sbr.rel (%p107) target = $region20
        $region19: #{tpu_custom_call.1} parent=15 // pred_region
          %s110 = sand.u32 %s25, 1
          %s111 = scalar_lea.sflag [#allocation10], %s110
          %s112 = sand.u32 %s25, 1
          %s113 = smul.addr %s112, 8
          %s114 = scalar_lea.vmem [#allocation9], %s113
          %116 = vsyncadd %s111, 0
          %s117 = smul.addr %s15, 8
          %s118 = scalar_lea.hbm %s0, %s117
          %s120 = sshll.u32 %s118, 4
          %s121 = int_to_ptr.hbm [resolvable:$true] %s120
          %s122 = sshll.u32 %s114, 4
          %s123 = int_to_ptr.vmem [resolvable:$true] %s122
          %125 = dma.hbm_to_vmem [thread:$0]  %s121, 128, %s123, %s111
        $region20: #{tpu_custom_call.1} parent=15 // pred_fallthru
          _
        // Predicated region
        $region21: #{tpu_custom_call.1} parent=15 // pred_check
          %p126 = pneg %p61
        $region22: #{tpu_custom_call.1} parent=15 // pred_check_branch
          %128 = sbr.rel (%p126) target = $region24
        $region23: #{tpu_custom_call.1} parent=15 // pred_region
          %s129 = sand.u32 %s51, 1
          %s130 = scalar_lea.sflag [#allocation13], %s129
          %s131 = sand.u32 %s51, 1
          %s132 = smul.addr %s131, 8
          %s133 = scalar_lea.vmem [#allocation12], %s132
          %135 = vsyncadd %s130, 0
          %s136 = smul.addr %s15, 8
          %s137 = scalar_lea.hbm %s1, %s136
          %s139 = sshll.u32 %s137, 4
          %s140 = int_to_ptr.hbm [resolvable:$true] %s139
          %s141 = sshll.u32 %s133, 4
          %s142 = int_to_ptr.vmem [resolvable:$true] %s141
          %144 = dma.hbm_to_vmem [thread:$0]  %s140, 128, %s142, %s130
        $region24: #{tpu_custom_call.1} parent=15 // pred_fallthru
          _
      $region16: #{tpu_custom_call.1} parent=5 // pred_fallthru
        _
      %p145 = scmp.le.s32.totalorder 1, %s15
      %p146 = scmp.lt.s32.totalorder %s15, 3
      %p147 = pnand %p145, %p146
      %p148 = pneg %p147
      // Predicated region
      $region25: #{tpu_custom_call.1} parent=5 // pred_check
        _
      $region26: #{tpu_custom_call.1} parent=5 // pred_check_branch
        %150 = sbr.rel (%p147) target = $region28
      $region27: #{tpu_custom_call.1} parent=5 // pred_region
        %s151 = ssub.s32 %s15, 1
        %s152 = sand.u32 %s28, 1
        %s153 = scalar_lea.sflag [#allocation10], %s152
        %s154 = sand.u32 %s28, 1
        %s155 = smul.addr %s154, 8
        %s156 = scalar_lea.vmem [#allocation9], %s155
        // Predicated region
        $region29: #{tpu_custom_call.1} parent=27 // pred_check
          %p157 = pneg %p41
        $region30: #{tpu_custom_call.1} parent=27 // pred_check_branch
          %159 = sbr.rel (%p157) target = $region32
        $region31: #{tpu_custom_call.1} parent=27 // pred_region
          %161 = dma.done %s153, 128
        $region32: #{tpu_custom_call.1} parent=27 // pred_fallthru
          _
        %s162 = sand.u32 %s54, 1
        %s163 = scalar_lea.sflag [#allocation13], %s162
        %s164 = sand.u32 %s54, 1
        %s165 = smul.addr %s164, 8
        %s166 = scalar_lea.vmem [#allocation12], %s165
        // Predicated region
        $region33: #{tpu_custom_call.1} parent=27 // pred_check
          %p167 = pneg %p67
        $region34: #{tpu_custom_call.1} parent=27 // pred_check_branch
          %169 = sbr.rel (%p167) target = $region36
        $region35: #{tpu_custom_call.1} parent=27 // pred_region
          %171 = dma.done %s163, 128
        $region36: #{tpu_custom_call.1} parent=27 // pred_fallthru
          _
        %s172 = sand.u32 %s28, 1
        %s173 = scalar_lea.sflag [#allocation10], %s172
        %s174 = sand.u32 %s28, 1
        %s175 = smul.addr %s174, 8
        %s176 = scalar_lea.vmem [#allocation9], %s175
        %p177 = pneg %p41
        %p178 = pneg %p38
        %s179 = sand.u32 %s54, 1
        %s180 = scalar_lea.sflag [#allocation13], %s179
        %s181 = sand.u32 %s54, 1
        %s182 = smul.addr %s181, 8
        %s183 = scalar_lea.vmem [#allocation12], %s182
        %p184 = pneg %p67
        %p185 = pneg %p64
        %p186 = pneg %p88
        %p187 = pneg %p85
        %p188 = scmp.eq.s32.totalorder %s20, 0
        // Predicated region
        $region37: #{tpu_custom_call.1} parent=27 // pred_check
          %p189 = pneg %p188
        $region38: #{tpu_custom_call.1} parent=27 // pred_check_branch
          %191 = sbr.rel (%p189) target = $region40
        $region39: #{tpu_custom_call.1} parent=27 // pred_region
          %vm192 = vcmask 253952
          %193 = vst.msk [vmem:[#allocation2] sm:$0x1] %vm192, 0.0
          %194 = vst.msk [vmem:[#allocation3] sm:$0x1] %vm192, 0.0
          %195 = vst.msk [vmem:[#allocation4] sm:$0x1] %vm192, 0.0
          %196 = vst.msk [vmem:[#allocation5] sm:$0x1] %vm192, 0.0
          %197 = vst.msk [vmem:[#allocation6] sm:$0x1] %vm192, 0.0
          %vm198 = vcmask 261120
          %199 = vst.msk [vmem:[#allocation7] sm:$0xff] %vm198, 0.0
          %200 = vst.msk [vmem:[#allocation7 + $0x8] sm:$0xff] %vm198, 0.0
          %201 = vst.msk [vmem:[#allocation7 + $0x10] sm:$0xff] %vm198, 0.0
          %202 = vst.msk [vmem:[#allocation7 + $0x18] sm:$0xff] %vm198, 0.0
          %203 = vst.msk [vmem:[#allocation8] sm:$0xff] %vm198, 0.0
          %204 = vst.msk [vmem:[#allocation8 + $0x8] sm:$0xff] %vm198, 0.0
          %205 = vst.msk [vmem:[#allocation8 + $0x10] sm:$0xff] %vm198, 0.0
          %206 = vst.msk [vmem:[#allocation8 + $0x18] sm:$0xff] %vm198, 0.0
        $region40: #{tpu_custom_call.1} parent=27 // pred_fallthru
          _
        %v207 = vld [vmem:[%s156] sm:$0xff]
        %v208 = vld [vmem:[%s166] sm:$0xff]
        %v209 = vsub.f32 %v207, %v208
        %v210 = vld [vmem:[#allocation2] sm:$0x1]
        %v211 = vmul.f32 %v209, %v209
        %vm212 = vcmask 261120
        %v213 = vsel %vm212, %v211, 0.0
        %v214 = vrot.slane %v213, 4
        %v215 = vadd.f32 %v213, %v214
        %v216 = vrot.slane %v215, 2
        %v217 = vadd.f32 %v215, %v216
        %v218 = vrot.slane %v217, 1
        %v219 = vadd.f32 %v217, %v218
        %v220 = vadd.f32 %v210, %v219
        %vm221 = vcmask 253952
        %222 = vst.msk [vmem:[#allocation2] sm:$0x1] %vm221, %v220
        %v223 = vld [vmem:[#allocation3] sm:$0x1]
        %v224 = vsel %vm212, %v207, 0.0
        %v225 = vrot.slane %v224, 4
        %v226 = vadd.f32 %v224, %v225
        %v227 = vrot.slane %v226, 2
        %v228 = vadd.f32 %v226, %v227
        %v229 = vrot.slane %v228, 1
        %v230 = vadd.f32 %v228, %v229
        %v231 = vadd.f32 %v223, %v230
        %232 = vst.msk [vmem:[#allocation3] sm:$0x1] %vm221, %v231
        %v233 = vld [vmem:[#allocation4] sm:$0x1]
        %v234 = vsel %vm212, %v208, 0.0
        %v235 = vrot.slane %v234, 4
        %v236 = vadd.f32 %v234, %v235
        %v237 = vrot.slane %v236, 2
        %v238 = vadd.f32 %v236, %v237
        %v239 = vrot.slane %v238, 1
        %v240 = vadd.f32 %v238, %v239
        %v241 = vadd.f32 %v233, %v240
        %242 = vst.msk [vmem:[#allocation4] sm:$0x1] %vm221, %v241
        %v243 = vld [vmem:[#allocation5] sm:$0x1]
        %v244 = vmul.f32 %v207, %v207
        %v245 = vsel %vm212, %v244, 0.0
        %v246 = vrot.slane %v245, 4
        %v247 = vadd.f32 %v245, %v246
        %v248 = vrot.slane %v247, 2
        %v249 = vadd.f32 %v247, %v248
        %v250 = vrot.slane %v249, 1
        %v251 = vadd.f32 %v249, %v250
        %v252 = vadd.f32 %v243, %v251
        %253 = vst.msk [vmem:[#allocation5] sm:$0x1] %vm221, %v252
        %v254 = vld [vmem:[#allocation6] sm:$0x1]
        %v255 = vmul.f32 %v208, %v208
        %v256 = vsel %vm212, %v255, 0.0
        %v257 = vrot.slane %v256, 4
        %v258 = vadd.f32 %v256, %v257
        %v259 = vrot.slane %v258, 2
        %v260 = vadd.f32 %v258, %v259
        %v261 = vrot.slane %v260, 1
        %v262 = vadd.f32 %v260, %v261
        %v263 = vadd.f32 %v254, %v262
        %264 = vst.msk [vmem:[#allocation6] sm:$0x1] %vm221, %v263
        %v265 = vld [vmem:[#allocation7] sm:$0xff]
        %v266 = vld [vmem:[#allocation7 + $0x8] sm:$0xff]
        %v267 = vld [vmem:[#allocation7 + $0x10] sm:$0xff]
        %v268 = vld [vmem:[#allocation7 + $0x18] sm:$0xff]
        %269 = vxpose.xlu0.b32.start [1/16] %v207, 128
        %270 = vxpose.xlu0.b32.cont [2/16] 0.0, 128
        %271 = vxpose.xlu0.b32.cont [3/16] 0.0, 128
        %272 = vxpose.xlu0.b32.cont [4/16] 0.0, 128
        %273 = vxpose.xlu0.b32.cont [5/16] 0.0, 128
        %274 = vxpose.xlu0.b32.cont [6/16] 0.0, 128
        %275 = vxpose.xlu0.b32.cont [7/16] 0.0, 128
        %276 = vxpose.xlu0.b32.cont [8/16] 0.0, 128
        %277 = vxpose.xlu0.b32.cont [9/16] 0.0, 128
        %278 = vxpose.xlu0.b32.cont [10/16] 0.0, 128
        %279 = vxpose.xlu0.b32.cont [11/16] 0.0, 128
        %280 = vxpose.xlu0.b32.cont [12/16] 0.0, 128
        %281 = vxpose.xlu0.b32.cont [13/16] 0.0, 128
        %282 = vxpose.xlu0.b32.cont [14/16] 0.0, 128
        %283 = vxpose.xlu0.b32.cont [15/16] 0.0, 128
        %284 = vxpose.xlu0.b32.end [16/16] 0.0, 128
        %v285 = vpop.trf.xlu0
        %v286 = vpop.trf.xlu0
        %v287 = vpop.trf.xlu0
        %v288 = vpop.trf.xlu0
        %v289 = vpop.trf.xlu0
        %v290 = vpop.trf.xlu0
        %v291 = vpop.trf.xlu0
        %v292 = vpop.trf.xlu0
        %v293 = vpop.trf.xlu0
        %v294 = vpop.trf.xlu0
        %v295 = vpop.trf.xlu0
        %v296 = vpop.trf.xlu0
        %v297 = vpop.trf.xlu0
        %v298 = vpop.trf.xlu0
        %v299 = vpop.trf.xlu0
        %v300 = vpop.trf.xlu0
        %vm301 = vcmask 64512
        %v303 = vsel %vm301, %v285, 0
        %v306 = vsel %vm301, %v286, 0
        %v309 = vsel %vm301, %v287, 0
        %v312 = vsel %vm301, %v288, 0
        %314 = vmatpush.msra.mxu0 0.0
        %315 = vmatpush.msra.mxu0 0.0
        %316 = vmatpush.msra.mxu0 0.0
        %317 = vmatpush.msra.mxu0 0.0
        %318 = vmatpush.msra.mxu0 0.0
        %319 = vmatpush.msra.mxu0 0.0
        %320 = vmatpush.msra.mxu0 0.0
        %321 = vmatpush.msra.mxu0 0.0
        %322 = vmatpush.msra.mxu0 0.0
        %323 = vmatpush.msra.mxu0 0.0
        %324 = vmatpush.msra.mxu0 0.0
        %325 = vmatpush.msra.mxu0 0.0
        %326 = vmatpush.msra.mxu0 0.0
        %327 = vmatpush.msra.mxu0 0.0
        %328 = vmatpush.msra.mxu0 0.0
        %329 = vmatpush.msra.mxu0 %v207
        %330 = vmatmul.f32.gmra.mxu0 %v303
        %v331 = vpop.f32.mrf.mxu0
        %v332 = vadd.f32 0.0, %v331
        %333 = vmatmul.f32.gmra.mxu0 %v306
        %v334 = vpop.f32.mrf.mxu0
        %v335 = vadd.f32 0.0, %v334
        %336 = vmatmul.f32.gmra.mxu0 %v309
        %v337 = vpop.f32.mrf.mxu0
        %v338 = vadd.f32 0.0, %v337
        %339 = vmatmul.f32.gmra.mxu0 %v312
        %v340 = vpop.f32.mrf.mxu0
        %v341 = vadd.f32 0.0, %v340
        %342 = vdwg.mxu0
        %v343 = vadd.f32 %v265, %v332
        %v344 = vadd.f32 %v266, %v335
        %v345 = vadd.f32 %v267, %v338
        %v346 = vadd.f32 %v268, %v341
        %347 = vst.msk [vmem:[#allocation7] sm:$0xff] %vm212, %v343
        %348 = vst.msk [vmem:[#allocation7 + $0x8] sm:$0xff] %vm212, %v344
        %349 = vst.msk [vmem:[#allocation7 + $0x10] sm:$0xff] %vm212, %v345
        %350 = vst.msk [vmem:[#allocation7 + $0x18] sm:$0xff] %vm212, %v346
        %v351 = vld [vmem:[#allocation8] sm:$0xff]
        %v352 = vld [vmem:[#allocation8 + $0x8] sm:$0xff]
        %v353 = vld [vmem:[#allocation8 + $0x10] sm:$0xff]
        %v354 = vld [vmem:[#allocation8 + $0x18] sm:$0xff]
        %355 = vxpose.xlu0.b32.start [1/16] %v208, 128
        %356 = vxpose.xlu0.b32.cont [2/16] 0.0, 128
        %357 = vxpose.xlu0.b32.cont [3/16] 0.0, 128
        %358 = vxpose.xlu0.b32.cont [4/16] 0.0, 128
        %359 = vxpose.xlu0.b32.cont [5/16] 0.0, 128
        %360 = vxpose.xlu0.b32.cont [6/16] 0.0, 128
        %361 = vxpose.xlu0.b32.cont [7/16] 0.0, 128
        %362 = vxpose.xlu0.b32.cont [8/16] 0.0, 128
        %363 = vxpose.xlu0.b32.cont [9/16] 0.0, 128
        %364 = vxpose.xlu0.b32.cont [10/16] 0.0, 128
        %365 = vxpose.xlu0.b32.cont [11/16] 0.0, 128
        %366 = vxpose.xlu0.b32.cont [12/16] 0.0, 128
        %367 = vxpose.xlu0.b32.cont [13/16] 0.0, 128
        %368 = vxpose.xlu0.b32.cont [14/16] 0.0, 128
        %369 = vxpose.xlu0.b32.cont [15/16] 0.0, 128
        %370 = vxpose.xlu0.b32.end [16/16] 0.0, 128
        %v371 = vpop.trf.xlu0
        %v372 = vpop.trf.xlu0
        %v373 = vpop.trf.xlu0
        %v374 = vpop.trf.xlu0
        %v375 = vpop.trf.xlu0
        %v376 = vpop.trf.xlu0
        %v377 = vpop.trf.xlu0
        %v378 = vpop.trf.xlu0
        %v379 = vpop.trf.xlu0
        %v380 = vpop.trf.xlu0
        %v381 = vpop.trf.xlu0
        %v382 = vpop.trf.xlu0
        %v383 = vpop.trf.xlu0
        %v384 = vpop.trf.xlu0
        %v385 = vpop.trf.xlu0
        %v386 = vpop.trf.xlu0
        %v388 = vsel %vm301, %v371, 0
        %v391 = vsel %vm301, %v372, 0
        %v394 = vsel %vm301, %v373, 0
        %v397 = vsel %vm301, %v374, 0
        %399 = vmatpush.msra.mxu0 0.0
        %400 = vmatpush.msra.mxu0 0.0
        %401 = vmatpush.msra.mxu0 0.0
        %402 = vmatpush.msra.mxu0 0.0
        %403 = vmatpush.msra.mxu0 0.0
        %404 = vmatpush.msra.mxu0 0.0
        %405 = vmatpush.msra.mxu0 0.0
        %406 = vmatpush.msra.mxu0 0.0
        %407 = vmatpush.msra.mxu0 0.0
        %408 = vmatpush.msra.mxu0 0.0
        %409 = vmatpush.msra.mxu0 0.0
        %410 = vmatpush.msra.mxu0 0.0
        %411 = vmatpush.msra.mxu0 0.0
        %412 = vmatpush.msra.mxu0 0.0
        %413 = vmatpush.msra.mxu0 0.0
        %414 = vmatpush.msra.mxu0 %v208
        %415 = vmatmul.f32.gmra.mxu0 %v388
        %v416 = vpop.f32.mrf.mxu0
        %v417 = vadd.f32 0.0, %v416
        %418 = vmatmul.f32.gmra.mxu0 %v391
        %v419 = vpop.f32.mrf.mxu0
        %v420 = vadd.f32 0.0, %v419
        %421 = vmatmul.f32.gmra.mxu0 %v394
        %v422 = vpop.f32.mrf.mxu0
        %v423 = vadd.f32 0.0, %v422
        %424 = vmatmul.f32.gmra.mxu0 %v397
        %v425 = vpop.f32.mrf.mxu0
        %v426 = vadd.f32 0.0, %v425
        %427 = vdwg.mxu0
        %v428 = vadd.f32 %v351, %v417
        %v429 = vadd.f32 %v352, %v420
        %v430 = vadd.f32 %v353, %v423
        %v431 = vadd.f32 %v354, %v426
        %432 = vst.msk [vmem:[#allocation8] sm:$0xff] %vm212, %v428
        %433 = vst.msk [vmem:[#allocation8 + $0x8] sm:$0xff] %vm212, %v429
        %434 = vst.msk [vmem:[#allocation8 + $0x10] sm:$0xff] %vm212, %v430
        %435 = vst.msk [vmem:[#allocation8 + $0x18] sm:$0xff] %vm212, %v431
        %p436 = scmp.eq.s32.totalorder %s20, 1
        // Predicated region
        $region41: #{tpu_custom_call.1} parent=27 // pred_check
          %p437 = pneg %p436
        $region42: #{tpu_custom_call.1} parent=27 // pred_check_branch
          %439 = sbr.rel (%p437) target = $region44
        $region43: #{tpu_custom_call.1} parent=27 // pred_region
          %v440 = vld [vmem:[#allocation2] sm:$0x1]
          %v441 = vsel %vm221, %v440, 0.0
          %442 = vadd.xlane.f32.xlu0 %v441
          %v443 = vpop.xlane.xlu0 %442
          %v444 = vrot.slane %v443, 4
          %v445 = vadd.f32 %v443, %v444
          %v446 = vrot.slane %v445, 2
          %v447 = vadd.f32 %v445, %v446
          %v448 = vrot.slane %v447, 1
          %v449 = vadd.f32 %v447, %v448
          %s450 = vtos %v449
          %v451 = vrcp.pop 512.0
          %v452 = vmul.f32 512.0, %v451
          %v453 = vsub.f32 1.0, %v452
          %v454 = vmul.f32 %v451, %v453
          %v455 = vadd.f32 %v451, %v454
          %vm456 = vweird.f32 %v451
          %v457 = vsel %vm456, %v451, %v455
          %s458 = vtos %v457
          %s459 = smul.f32 %s450, %s458
          %s460 = smul.f32 %s459, 25.0
          %v461 = vld [vmem:[#allocation3] sm:$0x1]
          %v462 = vld [vmem:[#allocation5] sm:$0x1]
          %v463 = vmul.f32 %v461, %v461
          %v464 = vmul.f32 %v463, 0.0625
          %v465 = vsub.f32 %v462, %v464
          %v466 = vmul.f32 %v465, 0.06666667
          %v467 = vmax.f32 %v466, 0.0
          %v468 = vrsqrt.pop %v467
          %v469 = vmul.f32 %v468, %v467
          %v470 = vmul.f32 %v469, %v468
          %v471 = vmul.f32 0.5, %v470
          %v472 = vsub.f32 1.5, %v471
          %v473 = vmul.f32 %v468, %v472
          %v474 = vmul.f32 %v467, %v473
          %vm475 = vcmp.eq.f32.partialorder %v467, inf
          %v476 = vsel %vm475, %v467, %v474
          %vm477 = vcmp.eq.f32.partialorder %v467, 0.0
          %v478 = vand.u32 %v467, 2147483648
          %v479 = vsel %vm477, %v478, %v476
          %v480 = vsub.f32 1.0, %v479
          %v481 = vmax.f32 %v480, 0.0
          %v482 = vsel %vm221, %v481, 0.0
          %483 = vadd.xlane.f32.xlu0 %v482
          %v484 = vpop.xlane.xlu0 %483
          %v485 = vrot.slane %v484, 4
          %v486 = vadd.f32 %v484, %v485
          %v487 = vrot.slane %v486, 2
          %v488 = vadd.f32 %v486, %v487
          %v489 = vrot.slane %v488, 1
          %v490 = vadd.f32 %v488, %v489
          %s491 = vtos %v490
          %v492 = vrcp.pop 32.0
          %v493 = vmul.f32 32.0, %v492
          %v494 = vsub.f32 1.0, %v493
          %v495 = vmul.f32 %v492, %v494
          %v496 = vadd.f32 %v492, %v495
          %vm497 = vweird.f32 %v492
          %v498 = vsel %vm497, %v492, %v496
          %s499 = vtos %v498
          %s500 = smul.f32 %s491, %s499
          %v501 = vld [vmem:[#allocation7] sm:$0xff]
          %v502 = vld [vmem:[#allocation7 + $0x8] sm:$0xff]
          %v503 = vld [vmem:[#allocation7 + $0x10] sm:$0xff]
          %v504 = vld [vmem:[#allocation7 + $0x18] sm:$0xff]
          %v505 = vmul.f32 %v501, %v501
          %v506 = vmul.f32 %v502, %v502
          %v507 = vmul.f32 %v503, %v503
          %v508 = vmul.f32 %v504, %v504
          %v509 = vsel %vm212, %v505, 0.0
          %v510 = vsel %vm212, %v506, 0.0
          %v511 = vadd.f32 %v509, %v510
          %v512 = vsel %vm212, %v507, 0.0
          %v513 = vadd.f32 %v511, %v512
          %v514 = vsel %vm212, %v508, 0.0
          %v515 = vadd.f32 %v513, %v514
          %516 = vadd.xlane.f32.xlu0 %v515
          %v517 = vpop.xlane.xlu0 %516
          %v518 = vrot.slane %v517, 4
          %v519 = vadd.f32 %v517, %v518
          %v520 = vrot.slane %v519, 2
          %v521 = vadd.f32 %v519, %v520
          %v522 = vrot.slane %v521, 1
          %v523 = vadd.f32 %v521, %v522
          %s524 = vtos %v523
          %v526 = vsel %vm212, %v461, 0
          %528 = vmatpush.msra.mxu0 0.0
          %529 = vmatpush.msra.mxu0 0.0
          %530 = vmatpush.msra.mxu0 0.0
          %531 = vmatpush.msra.mxu0 0.0
          %532 = vmatpush.msra.mxu0 0.0
          %533 = vmatpush.msra.mxu0 0.0
          %534 = vmatpush.msra.mxu0 0.0
          %535 = vmatpush.msra.mxu0 0.0
          %536 = vmatpush.msra.mxu0 0.0
          %537 = vmatpush.msra.mxu0 0.0
          %538 = vmatpush.msra.mxu0 0.0
          %539 = vmatpush.msra.mxu0 0.0
          %540 = vmatpush.msra.mxu0 %v504
          %541 = vmatpush.msra.mxu0 %v503
          %542 = vmatpush.msra.mxu0 %v502
          %543 = vmatpush.msra.mxu0 %v501
          %544 = vmatmul.f32.gmra.mxu0 %v526
          %v545 = vpop.f32.mrf.mxu0
          %v546 = vadd.f32 0.0, %v545
          %547 = vdwg.mxu0
          %v548 = vmul.f32 %v546, %v461
          %v549 = vsel %vm221, %v548, 0.0
          %550 = vadd.xlane.f32.xlu0 %v549
          %v551 = vpop.xlane.xlu0 %550
          %v552 = vrot.slane %v551, 4
          %v553 = vadd.f32 %v551, %v552
          %v554 = vrot.slane %v553, 2
          %v555 = vadd.f32 %v553, %v554
          %v556 = vrot.slane %v555, 1
          %v557 = vadd.f32 %v555, %v556
          %s558 = vtos %v557
          %v559 = vsel %vm221, %v463, 0.0
          %560 = vadd.xlane.f32.xlu0 %v559
          %v561 = vpop.xlane.xlu0 %560
          %v562 = vrot.slane %v561, 4
          %v563 = vadd.f32 %v561, %v562
          %v564 = vrot.slane %v563, 2
          %v565 = vadd.f32 %v563, %v564
          %v566 = vrot.slane %v565, 1
          %v567 = vadd.f32 %v565, %v566
          %s568 = vtos %v567
          %s569 = smul.f32 %s558, 0.125
          %s570 = ssub.f32 %s524, %s569
          %s571 = smul.f32 %s568, %s568
          %s572 = smul.f32 %s571, 0.0625
          %s573 = smul.f32 %s572, 0.0625
          %s574 = sadd.f32 %s570, %s573
          %s575 = smul.f32 %s574, 0.06666667
          %s576 = smul.f32 %s575, 0.06666667
          %v577 = vmul.f32 %v466, %v466
          %v578 = vsel %vm221, %v577, 0.0
          %579 = vadd.xlane.f32.xlu0 %v578
          %v580 = vpop.xlane.xlu0 %579
          %v581 = vrot.slane %v580, 4
          %v582 = vadd.f32 %v580, %v581
          %v583 = vrot.slane %v582, 2
          %v584 = vadd.f32 %v582, %v583
          %v585 = vrot.slane %v584, 1
          %v586 = vadd.f32 %v584, %v585
          %s587 = vtos %v586
          %s588 = ssub.f32 %s576, %s587
          %v589 = vrcp.pop 32.0
          %v590 = vmul.f32 32.0, %v589
          %v591 = vsub.f32 1.0, %v590
          %v592 = vmul.f32 %v589, %v591
          %v593 = vadd.f32 %v589, %v592
          %vm594 = vweird.f32 %v589
          %v595 = vsel %vm594, %v589, %v593
          %s596 = vtos %v595
          %s597 = smul.f32 %s588, %s596
          %v598 = vld [vmem:[#allocation4] sm:$0x1]
          %v599 = vld [vmem:[#allocation6] sm:$0x1]
          %v600 = vmul.f32 %v598, %v598
          %v601 = vmul.f32 %v600, 0.0625
          %v602 = vsub.f32 %v599, %v601
          %v603 = vmul.f32 %v602, 0.06666667
          %v604 = vmax.f32 %v603, 0.0
          %v605 = vrsqrt.pop %v604
          %v606 = vmul.f32 %v605, %v604
          %v607 = vmul.f32 %v606, %v605
          %v608 = vmul.f32 0.5, %v607
          %v609 = vsub.f32 1.5, %v608
          %v610 = vmul.f32 %v605, %v609
          %v611 = vmul.f32 %v604, %v610
          %vm612 = vcmp.eq.f32.partialorder %v604, inf
          %v613 = vsel %vm612, %v604, %v611
          %vm614 = vcmp.eq.f32.partialorder %v604, 0.0
          %v615 = vand.u32 %v604, 2147483648
          %v616 = vsel %vm614, %v615, %v613
          %v617 = vsub.f32 1.0, %v616
          %v618 = vmax.f32 %v617, 0.0
          %v619 = vsel %vm221, %v618, 0.0
          %620 = vadd.xlane.f32.xlu0 %v619
          %v621 = vpop.xlane.xlu0 %620
          %v622 = vrot.slane %v621, 4
          %v623 = vadd.f32 %v621, %v622
          %v624 = vrot.slane %v623, 2
          %v625 = vadd.f32 %v623, %v624
          %v626 = vrot.slane %v625, 1
          %v627 = vadd.f32 %v625, %v626
          %s628 = vtos %v627
          %v629 = vrcp.pop 32.0
          %v630 = vmul.f32 32.0, %v629
          %v631 = vsub.f32 1.0, %v630
          %v632 = vmul.f32 %v629, %v631
          %v633 = vadd.f32 %v629, %v632
          %vm634 = vweird.f32 %v629
          %v635 = vsel %vm634, %v629, %v633
          %s636 = vtos %v635
          %s637 = smul.f32 %s628, %s636
          %v638 = vld [vmem:[#allocation8] sm:$0xff]
          %v639 = vld [vmem:[#allocation8 + $0x8] sm:$0xff]
          %v640 = vld [vmem:[#allocation8 + $0x10] sm:$0xff]
          %v641 = vld [vmem:[#allocation8 + $0x18] sm:$0xff]
          %v642 = vmul.f32 %v638, %v638
          %v643 = vmul.f32 %v639, %v639
          %v644 = vmul.f32 %v640, %v640
          %v645 = vmul.f32 %v641, %v641
          %v646 = vsel %vm212, %v642, 0.0
          %v647 = vsel %vm212, %v643, 0.0
          %v648 = vadd.f32 %v646, %v647
          %v649 = vsel %vm212, %v644, 0.0
          %v650 = vadd.f32 %v648, %v649
          %v651 = vsel %vm212, %v645, 0.0
          %v652 = vadd.f32 %v650, %v651
          %653 = vadd.xlane.f32.xlu0 %v652
          %v654 = vpop.xlane.xlu0 %653
          %v655 = vrot.slane %v654, 4
          %v656 = vadd.f32 %v654, %v655
          %v657 = vrot.slane %v656, 2
          %v658 = vadd.f32 %v656, %v657
          %v659 = vrot.slane %v658, 1
          %v660 = vadd.f32 %v658, %v659
          %s661 = vtos %v660
          %v663 = vsel %vm212, %v598, 0
          %665 = vmatpush.msra.mxu0 0.0
          %666 = vmatpush.msra.mxu0 0.0
          %667 = vmatpush.msra.mxu0 0.0
          %668 = vmatpush.msra.mxu0 0.0
          %669 = vmatpush.msra.mxu0 0.0
          %670 = vmatpush.msra.mxu0 0.0
          %671 = vmatpush.msra.mxu0 0.0
          %672 = vmatpush.msra.mxu0 0.0
          %673 = vmatpush.msra.mxu0 0.0
          %674 = vmatpush.msra.mxu0 0.0
          %675 = vmatpush.msra.mxu0 0.0
          %676 = vmatpush.msra.mxu0 0.0
          %677 = vmatpush.msra.mxu0 %v641
          %678 = vmatpush.msra.mxu0 %v640
          %679 = vmatpush.msra.mxu0 %v639
          %680 = vmatpush.msra.mxu0 %v638
          %681 = vmatmul.f32.gmra.mxu0 %v663
          %v682 = vpop.f32.mrf.mxu0
          %v683 = vadd.f32 0.0, %v682
          %684 = vdwg.mxu0
          %v685 = vmul.f32 %v683, %v598
          %v686 = vsel %vm221, %v685, 0.0
          %687 = vadd.xlane.f32.xlu0 %v686
          %v688 = vpop.xlane.xlu0 %687
          %v689 = vrot.slane %v688, 4
          %v690 = vadd.f32 %v688, %v689
          %v691 = vrot.slane %v690, 2
          %v692 = vadd.f32 %v690, %v691
          %v693 = vrot.slane %v692, 1
          %v694 = vadd.f32 %v692, %v693
          %s695 = vtos %v694
          %v696 = vsel %vm221, %v600, 0.0
          %697 = vadd.xlane.f32.xlu0 %v696
          %v698 = vpop.xlane.xlu0 %697
          %v699 = vrot.slane %v698, 4
          %v700 = vadd.f32 %v698, %v699
          %v701 = vrot.slane %v700, 2
          %v702 = vadd.f32 %v700, %v701
          %v703 = vrot.slane %v702, 1
          %v704 = vadd.f32 %v702, %v703
          %s705 = vtos %v704
          %s706 = smul.f32 %s695, 0.125
          %s707 = ssub.f32 %s661, %s706
          %s708 = smul.f32 %s705, %s705
          %s709 = smul.f32 %s708, 0.0625
          %s710 = smul.f32 %s709, 0.0625
          %s711 = sadd.f32 %s707, %s710
          %s712 = smul.f32 %s711, 0.06666667
          %s713 = smul.f32 %s712, 0.06666667
          %v714 = vmul.f32 %v603, %v603
          %v715 = vsel %vm221, %v714, 0.0
          %716 = vadd.xlane.f32.xlu0 %v715
          %v717 = vpop.xlane.xlu0 %716
          %v718 = vrot.slane %v717, 4
          %v719 = vadd.f32 %v717, %v718
          %v720 = vrot.slane %v719, 2
          %v721 = vadd.f32 %v719, %v720
          %v722 = vrot.slane %v721, 1
          %v723 = vadd.f32 %v721, %v722
          %s724 = vtos %v723
          %s725 = ssub.f32 %s713, %s724
          %v726 = vrcp.pop 32.0
          %v727 = vmul.f32 32.0, %v726
          %v728 = vsub.f32 1.0, %v727
          %v729 = vmul.f32 %v726, %v728
          %v730 = vadd.f32 %v726, %v729
          %vm731 = vweird.f32 %v726
          %v732 = vsel %vm731, %v726, %v730
          %s733 = vtos %v732
          %s734 = smul.f32 %s725, %s733
          %s735 = sadd.f32 %s500, %s637
          %s736 = smul.f32 %s735, 15.0
          %s737 = smul.f32 %s736, 0.5
          %s738 = sadd.f32 %s597, %s734
          %s739 = smul.f32 %s738, 0.5
          %s740 = sadd.f32 %s460, %s737
          %s741 = sadd.f32 %s740, %s739
          %s742 = scalar_lea.smem [#allocation14], 0
          %743 = sst [smem:[%s742]] %s741
          %s744 = scalar_lea.smem [#allocation14], 1
          %745 = sst [smem:[%s744]] %s460
          %s746 = scalar_lea.smem [#allocation14], 2
          %747 = sst [smem:[%s746]] %s737
          %s748 = scalar_lea.smem [#allocation14], 3
          %749 = sst [smem:[%s748]] %s739
        $region44: #{tpu_custom_call.1} parent=27 // pred_fallthru
          _
        // Predicated region
        $region45: #{tpu_custom_call.1} parent=27 // pred_check
          %p750 = pneg %p85
        $region46: #{tpu_custom_call.1} parent=27 // pred_check_branch
          %752 = sbr.rel (%p750) target = $region48
        $region47: #{tpu_custom_call.1} parent=27 // pred_region
          %754 = vsyncadd [#allocation11], 0
          %s756 = sshll.u32 %s2, 4
          %s757 = int_to_ptr.hbm [resolvable:$true] %s756
          %759 = dma.smem_to_hbm [#allocation14], 16, %s757, [#allocation11]
        $region48: #{tpu_custom_call.1} parent=27 // pred_fallthru
          _
        // Predicated region
        $region49: #{tpu_custom_call.1} parent=27 // pred_check
          %p760 = pneg %p85
        $region50: #{tpu_custom_call.1} parent=27 // pred_check_branch
          %762 = sbr.rel (%p760) target = $region52
        $region51: #{tpu_custom_call.1} parent=27 // pred_region
          %764 = dma.done [#allocation11], 16
        $region52: #{tpu_custom_call.1} parent=27 // pred_fallthru
          _
        %765 = sfence
      $region28: #{tpu_custom_call.1} parent=5 // pred_fallthru
        _
      %p766 = scmp.le.s32.totalorder 2, %s15
      // Predicated region
      $region53: #{tpu_custom_call.1} parent=5 // pred_check
        %p767 = pneg %p766
      $region54: #{tpu_custom_call.1} parent=5 // pred_check_branch
        %769 = sbr.rel (%p767) target = $region56
      $region55: #{tpu_custom_call.1} parent=5 // pred_region
        %s770 = ssub.s32 %s15, 2
      $region56: #{tpu_custom_call.1} parent=5 // pred_fallthru
        _
    $region6: #{tpu_custom_call.1} parent=1 // loop_footer
      %s19 = sadd.s32 1, %s15
    $region7: #{tpu_custom_call.1} parent=1 // loop_footer_branch
      %14 = sbr.rel target = $region3
    $region8: #{tpu_custom_call.1} parent=1 // loop_exit
      _
    %771 = vsyncpa [#allocation10], 1
    %s772 = scalar_lea.sflag [#allocation10], 1
    %773 = vsyncpa %s772, 1
    %774 = vsyncpa [#allocation13], 1
    %s775 = scalar_lea.sflag [#allocation13], 1
    %776 = vsyncpa %s775, 1
    %777 = vsyncpa [#allocation11], 1
    %s778 = scalar_lea.sflag [#allocation11], 1
    %779 = vsyncpa %s778, 1

</llo_original>
